<compile_context>
chip_gen: v6e
topology: v6e:2x2x1
jax: 0.10.0
libtpu: 0.0.40
codegen_flags: <defaults>
</compile_context>

<pallas_src>
import functools

import jax
import jax.numpy as jnp
from jax.experimental import pallas as pl
from jax.experimental.pallas import tpu as pltpu


def _round_up(x, m):
    return (x + m - 1) // m * m


def _gemm_bias_kernel_single_k(p_ref, w_ref, b_ref, o_ref):
    # p_ref: (tP, K) bf16   w_ref: (K, tC) bf16   b_ref: (1, tC) f32
    # o_ref: (tP, tC)
    o_ref[...] = (jnp.dot(p_ref[...], w_ref[...],
                          preferred_element_type=jnp.float32)
                  + b_ref[...]).astype(o_ref.dtype)


def _gemm_bias_kernel_multi_k(p_ref, w_ref, b_ref, o_ref, acc_ref):
    # Fallback path for very large K (grid-tiled reduction).
    k = pl.program_id(2)

    @pl.when(k == 0)
    def _():
        acc_ref[...] = jnp.broadcast_to(b_ref[...], acc_ref.shape)

    acc_ref[...] += jnp.dot(p_ref[...], w_ref[...],
                            preferred_element_type=jnp.float32)

    @pl.when(k == pl.num_programs(2) - 1)
    def _():
        o_ref[...] = acc_ref[...].astype(o_ref.dtype)


def _im2col_nhwc(x_nhwc, kh, kw, stride, padding, dilation):
    """Extract conv patches. Returns (N, H_out*W_out, KH*KW*Cin), H_out, W_out."""
    # TODO(synk): replace this HBM-materialized im2col with in-kernel tap
    # accumulation to cut the ~KH*KW x input-read amplification.
    n, h, w, c = x_nhwc.shape
    x_pad = jnp.pad(x_nhwc, ((0, 0), (padding, padding), (padding, padding), (0, 0)))
    h_out = (h + 2 * padding - dilation * (kh - 1) - 1) // stride + 1
    w_out = (w + 2 * padding - dilation * (kw - 1) - 1) // stride + 1
    taps = []
    for i in range(kh):
        for j in range(kw):
            taps.append(
                x_pad[:,
                      i * dilation:i * dilation + stride * (h_out - 1) + 1:stride,
                      j * dilation:j * dilation + stride * (w_out - 1) + 1:stride,
                      :])
    patches = jnp.stack(taps, axis=-2)          # (N, H_out, W_out, KH*KW, Cin)
    return patches.reshape(n, h_out * w_out, kh * kw * c), h_out, w_out


@functools.partial(jax.jit, static_argnames=("stride", "padding", "dilation", "groups"))
def presolved_conv2d(x_nchw, solved_w, solved_b, learned_w, learned_b,
                     *, stride=1, padding=0, dilation=1, groups=1):
    """Forward pass of PresolvedConv2d (PyTorch NCHW / OIHW layouts in and out)."""
    assert groups == 1  # TODO(synk): grouped convolution not implemented in this kernel.

    # Fuse presolved + learned convs (== torch.cat(dim=1) of two convs on same input).
    w = jnp.concatenate([solved_w, learned_w], axis=0)   # (Cout, Cin, KH, KW)
    b = jnp.concatenate([solved_b, learned_b], axis=0)   # (Cout,)
    c_out, c_in, kh, kw = w.shape

    # --- glue: NHWC + im2col in bf16 (MXU-native operands, half the patch bytes) ---
    x_nhwc = jnp.transpose(x_nchw, (0, 2, 3, 1)).astype(jnp.bfloat16)
    patches, h_out, w_out = _im2col_nhwc(x_nhwc, kh, kw, stride, padding, dilation)
    n, p_len, k_len = patches.shape

    # Fold batch into the row (spatial) axis: one merged GEMM row dimension.
    rows = n * p_len
    patches = patches.reshape(rows, k_len)

    # Weight flattened to match im2col ordering: index = (i*KW + j)*Cin + c.
    w_flat = jnp.transpose(w, (2, 3, 1, 0)).reshape(kh * kw * c_in, c_out)
    w_flat = w_flat.astype(jnp.bfloat16)
    b_row = b.reshape(1, c_out).astype(jnp.float32)

    # --- tile-size policy (VMEM-aware; conservative enough for v7x's 64 MiB) ---
    tile_p = 512 if rows >= 512 else _round_up(rows, 8)          # merged row tiling
    rows_pad = _round_up(rows, tile_p)

    c_out_p = _round_up(c_out, 128)                              # lane-dense stores
    tile_c = 256 if c_out_p % 256 == 0 else 128

    # K always padded to a 128 multiple; keep it in a single tile unless huge.
    k_pad = _round_up(k_len, 128)
    if k_pad <= 4608:
        tile_k = k_pad
    else:                                                        # rare fallback
        tile_k = 512
        k_pad = _round_up(k_len, tile_k)
    n_k_tiles = k_pad // tile_k

    # Single pad for both row and K padding (one extra copy, not two).
    patches = jnp.pad(patches, ((0, rows_pad - rows), (0, k_pad - k_len)))
    w_flat = jnp.pad(w_flat, ((0, k_pad - k_len), (0, c_out_p - c_out)))
    b_row = jnp.pad(b_row, ((0, 0), (0, c_out_p - c_out)))

    # Grid: (row tiles, Cout tiles, K tiles).  K (reduction) innermost/arbitrary;
    # Cout is *inside* the row axis so the patch block (index independent of co)
    # stays VMEM-resident across all Cout tiles; only the small weight strip moves.
    n_p_tiles = rows_pad // tile_p
    n_c_tiles = c_out_p // tile_c
    grid = (n_p_tiles, n_c_tiles, n_k_tiles)

    patch_bytes = rows_pad * k_pad * 2
    weight_bytes = k_pad * c_out_p * 2
    cost = pl.CostEstimate(
        flops=int(2 * rows_pad * k_pad * c_out_p),
        transcendentals=0,
        bytes_accessed=int(patch_bytes * (n_c_tiles if n_k_tiles > 1 else 1)
                           + weight_bytes * n_p_tiles
                           + b_row.size * 4
                           + rows_pad * c_out_p * 4),
    )

    if n_k_tiles == 1:
        kernel = _gemm_bias_kernel_single_k
        scratch_shapes = []
    else:
        kernel = _gemm_bias_kernel_multi_k
        scratch_shapes = [pltpu.VMEM((tile_p, tile_c), jnp.float32)]

    out = pl.pallas_call(
        kernel,
        out_shape=jax.ShapeDtypeStruct((rows_pad, c_out_p), x_nchw.dtype),
        grid_spec=pltpu.PrefetchScalarGridSpec(
            num_scalar_prefetch=0,
            grid=grid,
            in_specs=[
                pl.BlockSpec((tile_p, tile_k), lambda p_, co, k_: (p_, k_)),
                pl.BlockSpec((tile_k, tile_c), lambda p_, co, k_: (k_, co)),
                pl.BlockSpec((1, tile_c), lambda p_, co, k_: (0, co)),
            ],
            out_specs=pl.BlockSpec((tile_p, tile_c),
                                   lambda p_, co, k_: (p_, co)),
            scratch_shapes=scratch_shapes,
        ),
        compiler_params=pltpu.CompilerParams(
            dimension_semantics=("parallel", "parallel", "arbitrary"),
            vmem_limit_bytes=32 * 1024 * 1024,
        ),
        cost_estimate=cost,
    )(patches, w_flat, b_row)

    # Drop row/channel padding and restore PyTorch's NCHW output layout.
    out = out[:rows, :c_out].reshape(n, h_out, w_out, c_out)
    return jnp.transpose(out, (0, 3, 1, 2))


if __name__ == "__main__":
    key = jax.random.PRNGKey(0)
    k_x, k_sw, k_sb, k_lw, k_lb = jax.random.split(key, 5)

    # Module config (small, consistent with the PyTorch __init__):
    in_channels = 4
    out_channels = 8
    solved_channels = 3          # presolved_weights.size(0)
    kernel_size = 3
    stride, padding, dilation, groups = 1, 1, 1, 1

    x = jax.random.normal(k_x, (2, in_channels, 16, 16), dtype=jnp.float32)

    solved_w = jax.random.normal(
        k_sw, (solved_channels, in_channels, kernel_size, kernel_size),
        dtype=jnp.float32) * 0.1
    solved_b = jax.random.normal(k_sb, (solved_channels,), dtype=jnp.float32) * 0.1
    learned_w = jax.random.normal(
        k_lw, (out_channels - solved_channels, in_channels, kernel_size, kernel_size),
        dtype=jnp.float32) * 0.1
    learned_b = jax.random.normal(
        k_lb, (out_channels - solved_channels,), dtype=jnp.float32) * 0.1

    y = presolved_conv2d(x, solved_w, solved_b, learned_w, learned_b,
                         stride=stride, padding=padding, dilation=dilation,
                         groups=groups)
    jax.block_until_ready(y)

    # Reference: XLA conv on bf16-rounded operands (the kernel feeds the MXU bf16
    # with f32 accumulation, so compare at matched input precision).
    # TODO(synk): offer an f32 / 3-pass-bf16 path if bit-closer-to-PyTorch numerics
    # are required.
    w_all = jnp.concatenate([solved_w, learned_w], axis=0)
    b_all = jnp.concatenate([solved_b, learned_b], axis=0)
    xq = x.astype(jnp.bfloat16).astype(jnp.float32)
    wq = w_all.astype(jnp.bfloat16).astype(jnp.float32)
    ref = jax.lax.conv_general_dilated(
        xq, wq, window_strides=(stride, stride),
        padding=[(padding, padding), (padding, padding)],
        rhs_dilation=(dilation, dilation),
        dimension_numbers=("NCHW", "OIHW", "NCHW"),
        precision=jax.lax.Precision.HIGHEST) + b_all[None, :, None, None]

    assert y.shape == (2, out_channels, 16, 16)
    assert jnp.allclose(y, ref, atol=5e-3, rtol=5e-3), \
        float(jnp.max(jnp.abs(y - ref)))

    print("KERNEL_OK")
</pallas_src>

<mosaic_0001>
module attributes {stable_mosaic.version = 11 : i64} {
  func.func @_gemm_bias_kernel_single_k(%arg0: i32, %arg1: i32, %arg2: i32, %arg3: memref<512x128xbf16, #tpu.memory_space<vmem>>, %arg4: memref<128x128xbf16, #tpu.memory_space<vmem>>, %arg5: memref<1x128xf32, #tpu.memory_space<vmem>>, %arg6: memref<512x128xf32, #tpu.memory_space<vmem>>) attributes {dimension_semantics = [#tpu.dimension_semantics<parallel>, #tpu.dimension_semantics<parallel>, #tpu.dimension_semantics<arbitrary>], iteration_bounds = array<i64: 1, 1, 1>, scalar_prefetch = 0 : i64, scratch_operands = 0 : i64, tpu.core_type = #tpu.core_type<tc>, window_params = [{transform_indices = @transform_0, window_bounds = array<i64: 512, 128>}, {transform_indices = @transform_1, window_bounds = array<i64: 128, 128>}, {transform_indices = @transform_2, window_bounds = array<i64: 1, 128>}, {transform_indices = @transform_3, window_bounds = array<i64: 512, 128>}]} {
    %c0 = arith.constant 0 : index
    %c0_0 = arith.constant 0 : index
    %0 = vector.load %arg3[%c0, %c0_0] : memref<512x128xbf16, #tpu.memory_space<vmem>>, vector<512x128xbf16>
    %c0_1 = arith.constant 0 : index
    %c0_2 = arith.constant 0 : index
    %1 = vector.load %arg4[%c0_1, %c0_2] : memref<128x128xbf16, #tpu.memory_space<vmem>>, vector<128x128xbf16>
    %cst = arith.constant dense<0.000000e+00> : vector<512x128xf32>
    %2 = tpu.matmul %0, %1, %cst {dimension_numbers = #tpu.dot_dimension_numbers<[1], [0], [0], [1], [0, 0, 1, 1], [], []>} : vector<512x128xbf16>, vector<128x128xbf16>, vector<512x128xf32> -> vector<512x128xf32>
    %c0_3 = arith.constant 0 : index
    %c0_4 = arith.constant 0 : index
    %3 = vector.load %arg5[%c0_3, %c0_4] : memref<1x128xf32, #tpu.memory_space<vmem>>, vector<1x128xf32>
    %4 = vector.broadcast %3 : vector<1x128xf32> to vector<512x128xf32>
    %5 = arith.addf %2, %4 : vector<512x128xf32>
    %c0_5 = arith.constant 0 : index
    %c0_6 = arith.constant 0 : index
    %6 = vector.load %arg6[%c0_5, %c0_6] : memref<512x128xf32, #tpu.memory_space<vmem>>, vector<512x128xf32>
    tpu.vector_store %arg6[%c0_5, %c0_6], %5 {strides = array<i32>} : memref<512x128xf32, #tpu.memory_space<vmem>>, vector<512x128xf32>,
    return
  }
  func.func @transform_0(%arg0: i32, %arg1: i32, %arg2: i32) -> (i32, i32) {
    %c0_i32 = arith.constant 0 : i32
    return %arg0, %arg2 : i32, i32
  }
  func.func @transform_1(%arg0: i32, %arg1: i32, %arg2: i32) -> (i32, i32) {
    %c0_i32 = arith.constant 0 : i32
    return %arg2, %arg1 : i32, i32
  }
  func.func @transform_2(%arg0: i32, %arg1: i32, %arg2: i32) -> (i32, i32) {
    %c0_i32 = arith.constant 0 : i32
    %c0_i32_0 = arith.constant 0 : i32
    return %c0_i32, %arg1 : i32, i32
  }
  func.func @transform_3(%arg0: i32, %arg1: i32, %arg2: i32) -> (i32, i32) {
    %c0_i32 = arith.constant 0 : i32
    return %arg0, %arg1 : i32, i32
  }
}

</mosaic_0001>

<llo_original>
// kernel: presolved_conv2d.1
$region0: #{presolved_conv2d.1}
  #allocation0 [shape = 'u32[]', space=smem, size = 0x4, offset = 0x4, fixed_abs, tag = 'smem constant byte address 0x4 - core index']
  #allocation1 [shape = 'u32[144,128]{1,0:T(1,128)}', space=vmem, size = 0x12000, scoped, tag = 'internal scratch']
  %s0 = inlined_call_operand.vmem [shape: bf16[512,128], index: 0, kind: input, shape index: {}]
  %s1 = inlined_call_operand.vmem [shape: bf16[128,128], index: 1, kind: input, shape index: {}]
  %s2 = inlined_call_operand.vmem [shape: f32[1,128], index: 2, kind: input, shape index: {}]
  %s3 = inlined_call_operand.vmem [shape: f32[512,128], index: 3, kind: output, shape index: {}]
  %s4 = sld [smem:[#allocation0]]
  $region22: #{presolved_conv2d.1} parent=0
    _
  %s6 = ssub.s32 1, %s4
  %s7 = scalar_select 0, %s6, %s4
  // Predicated region
  $region2: #{presolved_conv2d.1} parent=0 // pred_check
    _
  $region3: #{presolved_conv2d.1} parent=0 // pred_check_branch
    %9 = sbr.rel (0) target = $region5
  $region4: #{presolved_conv2d.1} parent=0 // pred_region
    _
  $region5: #{presolved_conv2d.1} parent=0 // pred_fallthru
    _
  // Predicated region
  $region6: #{presolved_conv2d.1} parent=0 // pred_check
    _
  $region7: #{presolved_conv2d.1} parent=0 // pred_check_branch
    %11 = sbr.rel (0) target = $region9
  $region8: #{presolved_conv2d.1} parent=0 // pred_region
    _
  $region9: #{presolved_conv2d.1} parent=0 // pred_fallthru
    _
  // Predicated region
  $region10: #{presolved_conv2d.1} parent=0 // pred_check
    _
  $region11: #{presolved_conv2d.1} parent=0 // pred_check_branch
    %13 = sbr.rel (0) target = $region13
  $region12: #{presolved_conv2d.1} parent=0 // pred_region
    _
  $region13: #{presolved_conv2d.1} parent=0 // pred_fallthru
    _
  %v15 = vld [vmem:[%s0] sm:$0xf]
  %v16 = vld [vmem:[%s0 + $0x4] sm:$0xf]
  %v17 = vld [vmem:[%s0 + $0x8] sm:$0xf]
  %v18 = vld [vmem:[%s0 + $0xc] sm:$0xf]
  %v19 = vld [vmem:[%s0 + $0x10] sm:$0xf]
  %v20 = vld [vmem:[%s0 + $0x14] sm:$0xf]
  %v21 = vld [vmem:[%s0 + $0x18] sm:$0xf]
  %v22 = vld [vmem:[%s0 + $0x1c] sm:$0xf]
  %v23 = vld [vmem:[%s0 + $0x20] sm:$0xf]
  %v24 = vld [vmem:[%s0 + $0x24] sm:$0xf]
  %v25 = vld [vmem:[%s0 + $0x28] sm:$0xf]
  %v26 = vld [vmem:[%s0 + $0x2c] sm:$0xf]
  %v27 = vld [vmem:[%s0 + $0x30] sm:$0xf]
  %v28 = vld [vmem:[%s0 + $0x34] sm:$0xf]
  %v29 = vld [vmem:[%s0 + $0x38] sm:$0xf]
  %v30 = vld [vmem:[%s0 + $0x3c] sm:$0xf]
  %v31 = vld [vmem:[%s0 + $0x40] sm:$0xf]
  %v32 = vld [vmem:[%s0 + $0x44] sm:$0xf]
  %v33 = vld [vmem:[%s0 + $0x48] sm:$0xf]
  %v34 = vld [vmem:[%s0 + $0x4c] sm:$0xf]
  %v35 = vld [vmem:[%s0 + $0x50] sm:$0xf]
  %v36 = vld [vmem:[%s0 + $0x54] sm:$0xf]
  %v37 = vld [vmem:[%s0 + $0x58] sm:$0xf]
  %v38 = vld [vmem:[%s0 + $0x5c] sm:$0xf]
  %v39 = vld [vmem:[%s0 + $0x60] sm:$0xf]
  %v40 = vld [vmem:[%s0 + $0x64] sm:$0xf]
  %v41 = vld [vmem:[%s0 + $0x68] sm:$0xf]
  %v42 = vld [vmem:[%s0 + $0x6c] sm:$0xf]
  %v43 = vld [vmem:[%s0 + $0x70] sm:$0xf]
  %v44 = vld [vmem:[%s0 + $0x74] sm:$0xf]
  %v45 = vld [vmem:[%s0 + $0x78] sm:$0xf]
  %v46 = vld [vmem:[%s0 + $0x7c] sm:$0xf]
  %v47 = vld [vmem:[%s0 + $0x80] sm:$0xf]
  %v48 = vld [vmem:[%s0 + $0x84] sm:$0xf]
  %v49 = vld [vmem:[%s0 + $0x88] sm:$0xf]
  %v50 = vld [vmem:[%s0 + $0x8c] sm:$0xf]
  %v51 = vld [vmem:[%s0 + $0x90] sm:$0xf]
  %v52 = vld [vmem:[%s0 + $0x94] sm:$0xf]
  %v53 = vld [vmem:[%s0 + $0x98] sm:$0xf]
  %v54 = vld [vmem:[%s0 + $0x9c] sm:$0xf]
  %v55 = vld [vmem:[%s0 + $0xa0] sm:$0xf]
  %v56 = vld [vmem:[%s0 + $0xa4] sm:$0xf]
  %v57 = vld [vmem:[%s0 + $0xa8] sm:$0xf]
  %v58 = vld [vmem:[%s0 + $0xac] sm:$0xf]
  %v59 = vld [vmem:[%s0 + $0xb0] sm:$0xf]
  %v60 = vld [vmem:[%s0 + $0xb4] sm:$0xf]
  %v61 = vld [vmem:[%s0 + $0xb8] sm:$0xf]
  %v62 = vld [vmem:[%s0 + $0xbc] sm:$0xf]
  %v63 = vld [vmem:[%s0 + $0xc0] sm:$0xf]
  %v64 = vld [vmem:[%s0 + $0xc4] sm:$0xf]
  %v65 = vld [vmem:[%s0 + $0xc8] sm:$0xf]
  %v66 = vld [vmem:[%s0 + $0xcc] sm:$0xf]
  %v67 = vld [vmem:[%s0 + $0xd0] sm:$0xf]
  %v68 = vld [vmem:[%s0 + $0xd4] sm:$0xf]
  %v69 = vld [vmem:[%s0 + $0xd8] sm:$0xf]
  %v70 = vld [vmem:[%s0 + $0xdc] sm:$0xf]
  %v71 = vld [vmem:[%s0 + $0xe0] sm:$0xf]
  %v72 = vld [vmem:[%s0 + $0xe4] sm:$0xf]
  %v73 = vld [vmem:[%s0 + $0xe8] sm:$0xf]
  %v74 = vld [vmem:[%s0 + $0xec] sm:$0xf]
  %v75 = vld [vmem:[%s0 + $0xf0] sm:$0xf]
  %v76 = vld [vmem:[%s0 + $0xf4] sm:$0xf]
  %v77 = vld [vmem:[%s0 + $0xf8] sm:$0xf]
  %v78 = vld [vmem:[%s0 + $0xfc] sm:$0xf]
  %v79 = vld [vmem:[%s1] sm:$0xf]
  %v80 = vld [vmem:[%s1 + $0x4] sm:$0xf]
  %v81 = vld [vmem:[%s1 + $0x8] sm:$0xf]
  %v82 = vld [vmem:[%s1 + $0xc] sm:$0xf]
  %v83 = vld [vmem:[%s1 + $0x10] sm:$0xf]
  %v84 = vld [vmem:[%s1 + $0x14] sm:$0xf]
  %v85 = vld [vmem:[%s1 + $0x18] sm:$0xf]
  %v86 = vld [vmem:[%s1 + $0x1c] sm:$0xf]
  %v87 = vld [vmem:[%s1 + $0x20] sm:$0xf]
  %v88 = vld [vmem:[%s1 + $0x24] sm:$0xf]
  %v89 = vld [vmem:[%s1 + $0x28] sm:$0xf]
  %v90 = vld [vmem:[%s1 + $0x2c] sm:$0xf]
  %v91 = vld [vmem:[%s1 + $0x30] sm:$0xf]
  %v92 = vld [vmem:[%s1 + $0x34] sm:$0xf]
  %v93 = vld [vmem:[%s1 + $0x38] sm:$0xf]
  %v94 = vld [vmem:[%s1 + $0x3c] sm:$0xf]
  %v95 = vld [vmem:[%s2] sm:$0x1]
  %v97 = vlaneseq
  %v98 = vshrl.u32 %v97, 7
  %v99 = vsub.s32 0, %v98
  %v100 = vrot.slane %v95, %v99
  %v166 = vunpack.c.l.b16 %v15
  %v167 = vunpack.c.l.b16 %v16
  %v168 = vunpack.c.l.b16 %v17
  %v169 = vunpack.c.l.b16 %v18
  %v170 = vunpack.c.l.b16 %v19
  %v171 = vunpack.c.l.b16 %v20
  %v172 = vunpack.c.l.b16 %v21
  %v173 = vunpack.c.l.b16 %v22
  %v174 = vunpack.c.l.b16 %v23
  %v175 = vunpack.c.l.b16 %v24
  %v176 = vunpack.c.l.b16 %v25
  %v177 = vunpack.c.l.b16 %v26
  %v178 = vunpack.c.l.b16 %v27
  %v179 = vunpack.c.l.b16 %v28
  %v180 = vunpack.c.l.b16 %v29
  %v181 = vunpack.c.l.b16 %v30
  %v182 = vunpack.c.l.b16 %v31
  %v183 = vunpack.c.l.b16 %v32
  %v184 = vunpack.c.l.b16 %v33
  %v185 = vunpack.c.l.b16 %v34
  %v186 = vunpack.c.l.b16 %v35
  %v187 = vunpack.c.l.b16 %v36
  %v188 = vunpack.c.l.b16 %v37
  %v189 = vunpack.c.l.b16 %v38
  %v190 = vunpack.c.l.b16 %v39
  %v191 = vunpack.c.l.b16 %v40
  %v192 = vunpack.c.l.b16 %v41
  %v193 = vunpack.c.l.b16 %v42
  %v194 = vunpack.c.l.b16 %v43
  %v195 = vunpack.c.l.b16 %v44
  %v196 = vunpack.c.l.b16 %v45
  %v197 = vunpack.c.l.b16 %v46
  %v198 = vunpack.c.l.b16 %v47
  %v199 = vunpack.c.l.b16 %v48
  %v200 = vunpack.c.l.b16 %v49
  %v201 = vunpack.c.l.b16 %v50
  %v202 = vunpack.c.l.b16 %v51
  %v203 = vunpack.c.l.b16 %v52
  %v204 = vunpack.c.l.b16 %v53
  %v205 = vunpack.c.l.b16 %v54
  %v206 = vunpack.c.l.b16 %v55
  %v207 = vunpack.c.l.b16 %v56
  %v208 = vunpack.c.l.b16 %v57
  %v209 = vunpack.c.l.b16 %v58
  %v210 = vunpack.c.l.b16 %v59
  %v211 = vunpack.c.l.b16 %v60
  %v212 = vunpack.c.l.b16 %v61
  %v213 = vunpack.c.l.b16 %v62
  %v214 = vunpack.c.l.b16 %v63
  %v215 = vunpack.c.l.b16 %v64
  %v216 = vunpack.c.l.b16 %v65
  %v217 = vunpack.c.l.b16 %v66
  %v218 = vunpack.c.l.b16 %v67
  %v219 = vunpack.c.l.b16 %v68
  %v220 = vunpack.c.l.b16 %v69
  %v221 = vunpack.c.l.b16 %v70
  %v222 = vunpack.c.l.b16 %v71
  %v223 = vunpack.c.l.b16 %v72
  %v224 = vunpack.c.l.b16 %v73
  %v225 = vunpack.c.l.b16 %v74
  %v226 = vunpack.c.l.b16 %v75
  %v227 = vunpack.c.l.b16 %v76
  %v228 = vunpack.c.l.b16 %v77
  %v229 = vunpack.c.l.b16 %v78
  %v230 = vpack.c.b16 %v167, %v166
  %v231 = vpack.c.b16 %v169, %v168
  %v232 = vpack.c.b16 %v171, %v170
  %v233 = vpack.c.b16 %v173, %v172
  %v234 = vpack.c.b16 %v175, %v174
  %v235 = vpack.c.b16 %v177, %v176
  %v236 = vpack.c.b16 %v179, %v178
  %v237 = vpack.c.b16 %v181, %v180
  %v238 = vpack.c.b16 %v183, %v182
  %v239 = vpack.c.b16 %v185, %v184
  %v240 = vpack.c.b16 %v187, %v186
  %v241 = vpack.c.b16 %v189, %v188
  %v242 = vpack.c.b16 %v191, %v190
  %v243 = vpack.c.b16 %v193, %v192
  %v244 = vpack.c.b16 %v195, %v194
  %v245 = vpack.c.b16 %v197, %v196
  %v246 = vpack.c.b16 %v199, %v198
  %v247 = vpack.c.b16 %v201, %v200
  %v248 = vpack.c.b16 %v203, %v202
  %v249 = vpack.c.b16 %v205, %v204
  %v250 = vpack.c.b16 %v207, %v206
  %v251 = vpack.c.b16 %v209, %v208
  %v252 = vpack.c.b16 %v211, %v210
  %v253 = vpack.c.b16 %v213, %v212
  %v254 = vpack.c.b16 %v215, %v214
  %v255 = vpack.c.b16 %v217, %v216
  %v256 = vpack.c.b16 %v219, %v218
  %v257 = vpack.c.b16 %v221, %v220
  %v258 = vpack.c.b16 %v223, %v222
  %v259 = vpack.c.b16 %v225, %v224
  %v260 = vpack.c.b16 %v227, %v226
  %v261 = vpack.c.b16 %v229, %v228
  %v310 = vunpack.c.l.b16 %v79
  %v311 = vunpack.c.l.b16 %v80
  %v312 = vunpack.c.l.b16 %v81
  %v313 = vunpack.c.l.b16 %v82
  %v314 = vunpack.c.l.b16 %v83
  %v315 = vunpack.c.l.b16 %v84
  %v316 = vunpack.c.l.b16 %v85
  %v317 = vunpack.c.l.b16 %v86
  %v318 = vunpack.c.l.b16 %v87
  %v319 = vunpack.c.l.b16 %v88
  %v320 = vunpack.c.l.b16 %v89
  %v321 = vunpack.c.l.b16 %v90
  %v322 = vunpack.c.l.b16 %v91
  %v323 = vunpack.c.l.b16 %v92
  %v324 = vunpack.c.l.b16 %v93
  %v325 = vunpack.c.l.b16 %v94
  %v326 = vpack.c.b16 %v311, %v310
  %v327 = vpack.c.b16 %v313, %v312
  %v328 = vpack.c.b16 %v315, %v314
  %v329 = vpack.c.b16 %v317, %v316
  %v330 = vpack.c.b16 %v319, %v318
  %v331 = vpack.c.b16 %v321, %v320
  %v332 = vpack.c.b16 %v323, %v322
  %v333 = vpack.c.b16 %v325, %v324
  %342 = vmatprep.subr.bf16.mxu0 0
  %343 = vmatpush1.bf16.msra.mxu0 %v333
  %344 = vmatprep.subr.bf16.mxu0 0
  %345 = vmatpush1.bf16.msra.mxu0 %v332
  %346 = vmatprep.subr.bf16.mxu0 0
  %347 = vmatpush1.bf16.msra.mxu0 %v331
  %348 = vmatprep.subr.bf16.mxu0 0
  %349 = vmatpush1.bf16.msra.mxu0 %v330
  %350 = vmatprep.subr.bf16.mxu0 0
  %351 = vmatpush1.bf16.msra.mxu0 %v329
  %352 = vmatprep.subr.bf16.mxu0 0
  %353 = vmatpush1.bf16.msra.mxu0 %v328
  %354 = vmatprep.subr.bf16.mxu0 0
  %355 = vmatpush1.bf16.msra.mxu0 %v327
  %356 = vmatprep.subr.bf16.mxu0 0
  %357 = vmatpush1.bf16.msra.mxu0 %v326
  %358 = vmatprep.subr.bf16.mxu0 0
  %359 = vmatpush2.bf16.msra.mxu0 0
  %360 = vmatprep.subr.bf16.mxu0 0
  %361 = vmatpush2.bf16.msra.mxu0 0
  %362 = vmatprep.subr.bf16.mxu0 0
  %363 = vmatpush2.bf16.msra.mxu0 0
  %364 = vmatprep.subr.bf16.mxu0 0
  %365 = vmatpush2.bf16.msra.mxu0 0
  %366 = vmatprep.subr.bf16.mxu0 0
  %367 = vmatpush2.bf16.msra.mxu0 0
  %368 = vmatprep.subr.bf16.mxu0 0
  %369 = vmatpush2.bf16.msra.mxu0 0
  %370 = vmatprep.subr.bf16.mxu0 0
  %371 = vmatpush2.bf16.msra.mxu0 0
  %372 = vmatprep.subr.bf16.mxu0 0
  %373 = vmatpush2.bf16.msra.mxu0 0
  %374 = vmatprep.mubr.bf16.mxu0 0
  %375 = vmatmul.mubr.bf16.gmra.mxu0 %v230
  %v376 = vpop.f32.mrf.mxu0
  %v377 = vadd.f32 %v100, %v376
  %v378 = vpop.f32.mrf.mxu0
  %v379 = vpop.f32.mrf.mxu0
  %v380 = vadd.f32 %v100, %v379
  %v381 = vpop.f32.mrf.mxu0
  %382 = vmatprep.mubr.bf16.mxu0 0
  %383 = vmatmul.mubr.bf16.gmra.mxu0 %v231
  %v384 = vpop.f32.mrf.mxu0
  %v385 = vadd.f32 %v100, %v384
  %v386 = vpop.f32.mrf.mxu0
  %v387 = vpop.f32.mrf.mxu0
  %v388 = vadd.f32 %v100, %v387
  %v389 = vpop.f32.mrf.mxu0
  %390 = vmatprep.mubr.bf16.mxu0 0
  %391 = vmatmul.mubr.bf16.gmra.mxu0 %v232
  %v392 = vpop.f32.mrf.mxu0
  %v393 = vadd.f32 %v100, %v392
  %v394 = vpop.f32.mrf.mxu0
  %v395 = vpop.f32.mrf.mxu0
  %v396 = vadd.f32 %v100, %v395
  %v397 = vpop.f32.mrf.mxu0
  %398 = vmatprep.mubr.bf16.mxu0 0
  %399 = vmatmul.mubr.bf16.gmra.mxu0 %v233
  %v400 = vpop.f32.mrf.mxu0
  %v401 = vadd.f32 %v100, %v400
  %v402 = vpop.f32.mrf.mxu0
  %v403 = vpop.f32.mrf.mxu0
  %v404 = vadd.f32 %v100, %v403
  %v405 = vpop.f32.mrf.mxu0
  %406 = vmatprep.mubr.bf16.mxu0 0
  %407 = vmatmul.mubr.bf16.gmra.mxu0 %v234
  %v408 = vpop.f32.mrf.mxu0
  %v409 = vadd.f32 %v100, %v408
  %v410 = vpop.f32.mrf.mxu0
  %v411 = vpop.f32.mrf.mxu0
  %v412 = vadd.f32 %v100, %v411
  %v413 = vpop.f32.mrf.mxu0
  %414 = vmatprep.mubr.bf16.mxu0 0
  %415 = vmatmul.mubr.bf16.gmra.mxu0 %v235
  %v416 = vpop.f32.mrf.mxu0
  %v417 = vadd.f32 %v100, %v416
  %v418 = vpop.f32.mrf.mxu0
  %v419 = vpop.f32.mrf.mxu0
  %v420 = vadd.f32 %v100, %v419
  %v421 = vpop.f32.mrf.mxu0
  %422 = vmatprep.mubr.bf16.mxu0 0
  %423 = vmatmul.mubr.bf16.gmra.mxu0 %v236
  %v424 = vpop.f32.mrf.mxu0
  %v425 = vadd.f32 %v100, %v424
  %v426 = vpop.f32.mrf.mxu0
  %v427 = vpop.f32.mrf.mxu0
  %v428 = vadd.f32 %v100, %v427
  %v429 = vpop.f32.mrf.mxu0
  %430 = vmatprep.mubr.bf16.mxu0 0
  %431 = vmatmul.mubr.bf16.gmra.mxu0 %v237
  %v432 = vpop.f32.mrf.mxu0
  %v433 = vadd.f32 %v100, %v432
  %v434 = vpop.f32.mrf.mxu0
  %v435 = vpop.f32.mrf.mxu0
  %v436 = vadd.f32 %v100, %v435
  %v437 = vpop.f32.mrf.mxu0
  %438 = vmatprep.mubr.bf16.mxu0 0
  %439 = vmatmul.mubr.bf16.gmra.mxu0 %v238
  %v440 = vpop.f32.mrf.mxu0
  %v441 = vadd.f32 %v100, %v440
  %v442 = vpop.f32.mrf.mxu0
  %v443 = vpop.f32.mrf.mxu0
  %v444 = vadd.f32 %v100, %v443
  %v445 = vpop.f32.mrf.mxu0
  %446 = vmatprep.mubr.bf16.mxu0 0
  %447 = vmatmul.mubr.bf16.gmra.mxu0 %v239
  %v448 = vpop.f32.mrf.mxu0
  %v449 = vadd.f32 %v100, %v448
  %v450 = vpop.f32.mrf.mxu0
  %v451 = vpop.f32.mrf.mxu0
  %v452 = vadd.f32 %v100, %v451
  %v453 = vpop.f32.mrf.mxu0
  %454 = vmatprep.mubr.bf16.mxu0 0
  %455 = vmatmul.mubr.bf16.gmra.mxu0 %v240
  %v456 = vpop.f32.mrf.mxu0
  %v457 = vadd.f32 %v100, %v456
  %v458 = vpop.f32.mrf.mxu0
  %v459 = vpop.f32.mrf.mxu0
  %v460 = vadd.f32 %v100, %v459
  %v461 = vpop.f32.mrf.mxu0
  %462 = vmatprep.mubr.bf16.mxu0 0
  %463 = vmatmul.mubr.bf16.gmra.mxu0 %v241
  %v464 = vpop.f32.mrf.mxu0
  %v465 = vadd.f32 %v100, %v464
  %v466 = vpop.f32.mrf.mxu0
  %v467 = vpop.f32.mrf.mxu0
  %v468 = vadd.f32 %v100, %v467
  %v469 = vpop.f32.mrf.mxu0
  %470 = vmatprep.mubr.bf16.mxu0 0
  %471 = vmatmul.mubr.bf16.gmra.mxu0 %v242
  %v472 = vpop.f32.mrf.mxu0
  %v473 = vadd.f32 %v100, %v472
  %v474 = vpop.f32.mrf.mxu0
  %v475 = vpop.f32.mrf.mxu0
  %v476 = vadd.f32 %v100, %v475
  %v477 = vpop.f32.mrf.mxu0
  %478 = vmatprep.mubr.bf16.mxu0 0
  %479 = vmatmul.mubr.bf16.gmra.mxu0 %v243
  %v480 = vpop.f32.mrf.mxu0
  %v481 = vadd.f32 %v100, %v480
  %v482 = vpop.f32.mrf.mxu0
  %v483 = vpop.f32.mrf.mxu0
  %v484 = vadd.f32 %v100, %v483
  %v485 = vpop.f32.mrf.mxu0
  %486 = vmatprep.mubr.bf16.mxu0 0
  %487 = vmatmul.mubr.bf16.gmra.mxu0 %v244
  %v488 = vpop.f32.mrf.mxu0
  %v489 = vadd.f32 %v100, %v488
  %v490 = vpop.f32.mrf.mxu0
  %v491 = vpop.f32.mrf.mxu0
  %v492 = vadd.f32 %v100, %v491
  %v493 = vpop.f32.mrf.mxu0
  %494 = vmatprep.mubr.bf16.mxu0 0
  %495 = vmatmul.mubr.bf16.gmra.mxu0 %v245
  %v496 = vpop.f32.mrf.mxu0
  %v497 = vadd.f32 %v100, %v496
  %v498 = vpop.f32.mrf.mxu0
  %v499 = vpop.f32.mrf.mxu0
  %v500 = vadd.f32 %v100, %v499
  %v501 = vpop.f32.mrf.mxu0
  %502 = vmatprep.mubr.bf16.mxu0 0
  %503 = vmatmul.mubr.bf16.gmra.mxu0 %v246
  %v504 = vpop.f32.mrf.mxu0
  %v505 = vadd.f32 %v100, %v504
  %v506 = vpop.f32.mrf.mxu0
  %v507 = vpop.f32.mrf.mxu0
  %v508 = vadd.f32 %v100, %v507
  %v509 = vpop.f32.mrf.mxu0
  %510 = vmatprep.mubr.bf16.mxu0 0
  %511 = vmatmul.mubr.bf16.gmra.mxu0 %v247
  %v512 = vpop.f32.mrf.mxu0
  %v513 = vadd.f32 %v100, %v512
  %v514 = vpop.f32.mrf.mxu0
  %v515 = vpop.f32.mrf.mxu0
  %v516 = vadd.f32 %v100, %v515
  %v517 = vpop.f32.mrf.mxu0
  %518 = vmatprep.mubr.bf16.mxu0 0
  %519 = vmatmul.mubr.bf16.gmra.mxu0 %v248
  %v520 = vpop.f32.mrf.mxu0
  %v521 = vadd.f32 %v100, %v520
  %v522 = vpop.f32.mrf.mxu0
  %v523 = vpop.f32.mrf.mxu0
  %v524 = vadd.f32 %v100, %v523
  %v525 = vpop.f32.mrf.mxu0
  %526 = vmatprep.mubr.bf16.mxu0 0
  %527 = vmatmul.mubr.bf16.gmra.mxu0 %v249
  %v528 = vpop.f32.mrf.mxu0
  %v529 = vadd.f32 %v100, %v528
  %v530 = vpop.f32.mrf.mxu0
  %v531 = vpop.f32.mrf.mxu0
  %v532 = vadd.f32 %v100, %v531
  %v533 = vpop.f32.mrf.mxu0
  %534 = vmatprep.mubr.bf16.mxu0 0
  %535 = vmatmul.mubr.bf16.gmra.mxu0 %v250
  %v536 = vpop.f32.mrf.mxu0
  %v537 = vadd.f32 %v100, %v536
  %v538 = vpop.f32.mrf.mxu0
  %v539 = vpop.f32.mrf.mxu0
  %v540 = vadd.f32 %v100, %v539
  %v541 = vpop.f32.mrf.mxu0
  %542 = vmatprep.mubr.bf16.mxu0 0
  %543 = vmatmul.mubr.bf16.gmra.mxu0 %v251
  %v544 = vpop.f32.mrf.mxu0
  %v545 = vadd.f32 %v100, %v544
  %v546 = vpop.f32.mrf.mxu0
  %v547 = vpop.f32.mrf.mxu0
  %v548 = vadd.f32 %v100, %v547
  %v549 = vpop.f32.mrf.mxu0
  %550 = vmatprep.mubr.bf16.mxu0 0
  %551 = vmatmul.mubr.bf16.gmra.mxu0 %v252
  %v552 = vpop.f32.mrf.mxu0
  %v553 = vadd.f32 %v100, %v552
  %v554 = vpop.f32.mrf.mxu0
  %v555 = vpop.f32.mrf.mxu0
  %v556 = vadd.f32 %v100, %v555
  %v557 = vpop.f32.mrf.mxu0
  %558 = vmatprep.mubr.bf16.mxu0 0
  %559 = vmatmul.mubr.bf16.gmra.mxu0 %v253
  %v560 = vpop.f32.mrf.mxu0
  %v561 = vadd.f32 %v100, %v560
  %v562 = vpop.f32.mrf.mxu0
  %v563 = vpop.f32.mrf.mxu0
  %v564 = vadd.f32 %v100, %v563
  %v565 = vpop.f32.mrf.mxu0
  %566 = vmatprep.mubr.bf16.mxu0 0
  %567 = vmatmul.mubr.bf16.gmra.mxu0 %v254
  %v568 = vpop.f32.mrf.mxu0
  %v569 = vadd.f32 %v100, %v568
  %v570 = vpop.f32.mrf.mxu0
  %v571 = vpop.f32.mrf.mxu0
  %v572 = vadd.f32 %v100, %v571
  %v573 = vpop.f32.mrf.mxu0
  %574 = vmatprep.mubr.bf16.mxu0 0
  %575 = vmatmul.mubr.bf16.gmra.mxu0 %v255
  %v576 = vpop.f32.mrf.mxu0
  %v577 = vadd.f32 %v100, %v576
  %v578 = vpop.f32.mrf.mxu0
  %v579 = vpop.f32.mrf.mxu0
  %v580 = vadd.f32 %v100, %v579
  %v581 = vpop.f32.mrf.mxu0
  %582 = vmatprep.mubr.bf16.mxu0 0
  %583 = vmatmul.mubr.bf16.gmra.mxu0 %v256
  %v584 = vpop.f32.mrf.mxu0
  %v585 = vadd.f32 %v100, %v584
  %v586 = vpop.f32.mrf.mxu0
  %v587 = vpop.f32.mrf.mxu0
  %v588 = vadd.f32 %v100, %v587
  %v589 = vpop.f32.mrf.mxu0
  %590 = vmatprep.mubr.bf16.mxu0 0
  %591 = vmatmul.mubr.bf16.gmra.mxu0 %v257
  %v592 = vpop.f32.mrf.mxu0
  %v593 = vadd.f32 %v100, %v592
  %v594 = vpop.f32.mrf.mxu0
  %v595 = vpop.f32.mrf.mxu0
  %v596 = vadd.f32 %v100, %v595
  %v597 = vpop.f32.mrf.mxu0
  %598 = vmatprep.mubr.bf16.mxu0 0
  %599 = vmatmul.mubr.bf16.gmra.mxu0 %v258
  %v600 = vpop.f32.mrf.mxu0
  %v601 = vadd.f32 %v100, %v600
  %v602 = vpop.f32.mrf.mxu0
  %v603 = vpop.f32.mrf.mxu0
  %v604 = vadd.f32 %v100, %v603
  %v605 = vpop.f32.mrf.mxu0
  %606 = vmatprep.mubr.bf16.mxu0 0
  %607 = vmatmul.mubr.bf16.gmra.mxu0 %v259
  %v608 = vpop.f32.mrf.mxu0
  %v609 = vadd.f32 %v100, %v608
  %v610 = vpop.f32.mrf.mxu0
  %v611 = vpop.f32.mrf.mxu0
  %v612 = vadd.f32 %v100, %v611
  %v613 = vpop.f32.mrf.mxu0
  %614 = vmatprep.mubr.bf16.mxu0 0
  %615 = vmatmul.mubr.bf16.gmra.mxu0 %v260
  %v616 = vpop.f32.mrf.mxu0
  %v617 = vadd.f32 %v100, %v616
  %v618 = vpop.f32.mrf.mxu0
  %v619 = vpop.f32.mrf.mxu0
  %v620 = vadd.f32 %v100, %v619
  %v621 = vpop.f32.mrf.mxu0
  %622 = vmatprep.mubr.bf16.mxu0 0
  %623 = vmatmul.mubr.bf16.gmra.mxu0 %v261
  %v624 = vpop.f32.mrf.mxu0
  %v625 = vadd.f32 %v100, %v624
  %v626 = vpop.f32.mrf.mxu0
  %v627 = vpop.f32.mrf.mxu0
  %v628 = vadd.f32 %v100, %v627
  %v629 = vpop.f32.mrf.mxu0
  %630 = vdwg.mxu0
  %631 = vst [vmem:[%s3] sm:$0xff] %v377
  %632 = vst [vmem:[%s3 + $0x8] sm:$0xff] %v380
  %633 = vst [vmem:[%s3 + $0x10] sm:$0xff] %v385
  %634 = vst [vmem:[%s3 + $0x18] sm:$0xff] %v388
  %635 = vst [vmem:[%s3 + $0x20] sm:$0xff] %v393
  %636 = vst [vmem:[%s3 + $0x28] sm:$0xff] %v396
  %637 = vst [vmem:[%s3 + $0x30] sm:$0xff] %v401
  %638 = vst [vmem:[%s3 + $0x38] sm:$0xff] %v404
  %639 = vst [vmem:[%s3 + $0x40] sm:$0xff] %v409
  %640 = vst [vmem:[%s3 + $0x48] sm:$0xff] %v412
  %641 = vst [vmem:[%s3 + $0x50] sm:$0xff] %v417
  %642 = vst [vmem:[%s3 + $0x58] sm:$0xff] %v420
  %643 = vst [vmem:[%s3 + $0x60] sm:$0xff] %v425
  %644 = vst [vmem:[%s3 + $0x68] sm:$0xff] %v428
  %645 = vst [vmem:[%s3 + $0x70] sm:$0xff] %v433
  %646 = vst [vmem:[%s3 + $0x78] sm:$0xff] %v436
  %647 = vst [vmem:[%s3 + $0x80] sm:$0xff] %v441
  %648 = vst [vmem:[%s3 + $0x88] sm:$0xff] %v444
  %649 = vst [vmem:[%s3 + $0x90] sm:$0xff] %v449
  %650 = vst [vmem:[%s3 + $0x98] sm:$0xff] %v452
  %651 = vst [vmem:[%s3 + $0xa0] sm:$0xff] %v457
  %652 = vst [vmem:[%s3 + $0xa8] sm:$0xff] %v460
  %653 = vst [vmem:[%s3 + $0xb0] sm:$0xff] %v465
  %654 = vst [vmem:[%s3 + $0xb8] sm:$0xff] %v468
  %655 = vst [vmem:[%s3 + $0xc0] sm:$0xff] %v473
  %656 = vst [vmem:[%s3 + $0xc8] sm:$0xff] %v476
  %657 = vst [vmem:[%s3 + $0xd0] sm:$0xff] %v481
  %658 = vst [vmem:[%s3 + $0xd8] sm:$0xff] %v484
  %659 = vst [vmem:[%s3 + $0xe0] sm:$0xff] %v489
  %660 = vst [vmem:[%s3 + $0xe8] sm:$0xff] %v492
  %661 = vst [vmem:[%s3 + $0xf0] sm:$0xff] %v497
  %662 = vst [vmem:[%s3 + $0xf8] sm:$0xff] %v500
  %663 = vst [vmem:[%s3 + $0x100] sm:$0xff] %v505
  %664 = vst [vmem:[%s3 + $0x108] sm:$0xff] %v508
  %665 = vst [vmem:[%s3 + $0x110] sm:$0xff] %v513
  %666 = vst [vmem:[%s3 + $0x118] sm:$0xff] %v516
  %667 = vst [vmem:[%s3 + $0x120] sm:$0xff] %v521
  %668 = vst [vmem:[%s3 + $0x128] sm:$0xff] %v524
  %669 = vst [vmem:[%s3 + $0x130] sm:$0xff] %v529
  %670 = vst [vmem:[%s3 + $0x138] sm:$0xff] %v532
  %671 = vst [vmem:[%s3 + $0x140] sm:$0xff] %v537
  %672 = vst [vmem:[%s3 + $0x148] sm:$0xff] %v540
  %673 = vst [vmem:[%s3 + $0x150] sm:$0xff] %v545
  %674 = vst [vmem:[%s3 + $0x158] sm:$0xff] %v548
  %675 = vst [vmem:[%s3 + $0x160] sm:$0xff] %v553
  %676 = vst [vmem:[%s3 + $0x168] sm:$0xff] %v556
  %677 = vst [vmem:[%s3 + $0x170] sm:$0xff] %v561
  %678 = vst [vmem:[%s3 + $0x178] sm:$0xff] %v564
  %679 = vst [vmem:[%s3 + $0x180] sm:$0xff] %v569
  %680 = vst [vmem:[%s3 + $0x188] sm:$0xff] %v572
  %681 = vst [vmem:[%s3 + $0x190] sm:$0xff] %v577
  %682 = vst [vmem:[%s3 + $0x198] sm:$0xff] %v580
  %683 = vst [vmem:[%s3 + $0x1a0] sm:$0xff] %v585
  %684 = vst [vmem:[%s3 + $0x1a8] sm:$0xff] %v588
  %685 = vst [vmem:[%s3 + $0x1b0] sm:$0xff] %v593
  %686 = vst [vmem:[%s3 + $0x1b8] sm:$0xff] %v596
  %687 = vst [vmem:[%s3 + $0x1c0] sm:$0xff] %v601
  %688 = vst [vmem:[%s3 + $0x1c8] sm:$0xff] %v604
  %689 = vst [vmem:[%s3 + $0x1d0] sm:$0xff] %v609
  %690 = vst [vmem:[%s3 + $0x1d8] sm:$0xff] %v612
  %691 = vst [vmem:[%s3 + $0x1e0] sm:$0xff] %v617
  %692 = vst [vmem:[%s3 + $0x1e8] sm:$0xff] %v620
  %693 = vst [vmem:[%s3 + $0x1f0] sm:$0xff] %v625
  %694 = vst [vmem:[%s3 + $0x1f8] sm:$0xff] %v628
  // Predicated region
  $region14: #{presolved_conv2d.1} parent=0 // pred_check
    _
  $region15: #{presolved_conv2d.1} parent=0 // pred_check_branch
    %696 = sbr.rel (0) target = $region17
  $region16: #{presolved_conv2d.1} parent=0 // pred_region
    _
  $region17: #{presolved_conv2d.1} parent=0 // pred_fallthru
    _
  // Predicated region
  $region18: #{presolved_conv2d.1} parent=0 // pred_check
    _
  $region19: #{presolved_conv2d.1} parent=0 // pred_check_branch
    %698 = sbr.rel (0) target = $region21
  $region20: #{presolved_conv2d.1} parent=0 // pred_region
    _
  $region21: #{presolved_conv2d.1} parent=0 // pred_fallthru
    _

</llo_original>
